<compile_context>
chip_gen: v7x
topology: tpu7x:2x2x1
jax: 0.10.0
libtpu: 0.0.40
codegen_flags: <defaults>
</compile_context>

<pallas_src>
import jax
import jax.numpy as jnp
from jax import lax
from jax.experimental import pallas as pl
from jax.experimental.pallas import tpu as pltpu

BN_EPS = 1e-5
NEG_SLOPE = 0.1  # matches nn.LeakyReLU(negative_slope=0.1) in the module


def _round_up(n, m):
    return ((n + m - 1) // m) * m


def _leaky_relu(x):
    return jnp.where(x >= 0, x, NEG_SLOPE * x)


# ----------------------------------------------------------------------------
# Kernel
# ----------------------------------------------------------------------------
def taskc_predict_kernel(
    x_ref,            # (bb, E)   f32 (native dtype; cast to bf16 in-kernel)
    bin_ref,          # (bb, 1)   int32
    w1_ref, b1_ref,   # (E, H1) bf16, (1, H1) f32   (BN1 folded in)
    w2_ref, b2_ref,   # (H1, H2) bf16, (1, H2) f32  (BN2 folded in)
    w3_ref, b3_ref,   # (H2, O)  bf16, (1, O)  f32
    o_ref,            # (bb, O)  f32
):
    mm_dtype = w1_ref.dtype

    # Linear 1 (+ folded BN) + LeakyReLU  (Dropout = identity in eval mode)
    x = x_ref[...].astype(mm_dtype)
    h = jnp.dot(x, w1_ref[...], preferred_element_type=jnp.float32)
    h = _leaky_relu(h + b1_ref[...])

    # Linear 2 (+ folded BN) + LeakyReLU  (Dropout = identity in eval mode)
    h = jnp.dot(h.astype(mm_dtype), w2_ref[...], preferred_element_type=jnp.float32)
    h = _leaky_relu(h + b2_ref[...])

    # Linear 3
    out = jnp.dot(h.astype(mm_dtype), w3_ref[...], preferred_element_type=jnp.float32)
    out = out + b3_ref[...]

    # Fused epilogue: rows with bin_pred == 0 are overridden with [1, 0, 0, 0].
    col = lax.broadcasted_iota(jnp.int32, out.shape, 1)
    onehot = (col == 0).astype(jnp.float32)
    is_zero = bin_ref[...] == 0          # (bb, 1), broadcasts over O
    o_ref[...] = jnp.where(is_zero, onehot, out).astype(o_ref.dtype)


# ----------------------------------------------------------------------------
# Host-side parameter folding (eval-mode BatchNorm -> Linear)
# ----------------------------------------------------------------------------
def fold_bn_params(p):
    s1 = p["g1"] / jnp.sqrt(p["v1"] + BN_EPS)   # exact sqrt (matches reference)
    s2 = p["g2"] / jnp.sqrt(p["v2"] + BN_EPS)
    return dict(
        w1=p["w1"] * s1,                                   # per-output-column scale
        b1=(p["b1"] - p["m1"]) * s1 + p["be1"],
        w2=p["w2"] * s2,
        b2=(p["b2"] - p["m2"]) * s2 + p["be2"],
        w3=p["w3"],
        b3=p["b3"],
    )


# ----------------------------------------------------------------------------
# Tiling / VMEM budgeting
# ----------------------------------------------------------------------------
def _choose_block_b(B, *, max_block_b=8192, split_threshold=1024):
    """Big batch tiles (kernel is step-overhead bound); >=2 parallel steps for v7x."""
    if B <= split_threshold:
        bb = _round_up(B, 16) if B >= 16 else _round_up(B, 8)
    else:
        # Split the batch across >=2 grid steps so dimension_semantics=("parallel",)
        # can shard it over v7x's two TensorCores.
        bb = _round_up(pl.cdiv(B, 2), 16)
    return min(bb, max_block_b)


def _estimate_vmem_bytes(bb, E, H1, H2, O):
    per_row = (
        E * 4 * 2            # x f32, double-buffered
        + O * 4 * 2          # out f32, double-buffered
        + 1 * 4 * 2          # bin_pred i32, double-buffered
        + (H1 + H2) * 4      # f32 intermediates
        + (E + H1 + H2) * 2  # bf16 cast copies
    )
    weights = (E * H1 + H1 * H2 + H2 * O) * 2 + (H1 + H2 + O) * 4
    return bb * per_row + 2 * weights + (1 << 20)


# ----------------------------------------------------------------------------
# Wrapper
# ----------------------------------------------------------------------------
def taskc_predict_layer_h(x, bin_pred, params, *, max_block_b=8192, use_bf16=True):
    """x: (B, ...) flattened to (B, emb). bin_pred: (B,) int. Returns (B, out)."""
    B = x.shape[0]
    x2 = x.reshape(B, -1)
    if x2.dtype != jnp.float32:
        x2 = x2.astype(jnp.float32)
    E = x2.shape[1]

    f = fold_bn_params(params)
    H1 = f["w1"].shape[1]
    H2 = f["w2"].shape[1]
    O = f["w3"].shape[1]
    assert O == 4, "forward() hard-codes a 4-wide one-hot override; out_size must be 4"

    mm_dtype = jnp.bfloat16 if use_bf16 else jnp.float32
    w1 = f["w1"].astype(mm_dtype)
    w2 = f["w2"].astype(mm_dtype)
    w3 = f["w3"].astype(mm_dtype)
    b1 = f["b1"].astype(jnp.float32)
    b2 = f["b2"].astype(jnp.float32)
    b3 = f["b3"].astype(jnp.float32)

    bin2 = bin_pred.reshape(B, 1).astype(jnp.int32)

    bb = _choose_block_b(B, max_block_b=max_block_b)
    grid = (pl.cdiv(B, bb),)   # edge tile (if any) has masked OOB writes; no host pad

    # Generation-safe VMEM cap: never below the 16 MiB scoped default, never
    # above ~48 MiB (v7x has only 64 MiB physical VMEM).
    vmem_limit = int(min(max(2 * _estimate_vmem_bytes(bb, E, H1, H2, O), 16 << 20),
                         48 << 20))

    itemsize = 2 if use_bf16 else 4
    cost = pl.CostEstimate(
        flops=2 * B * (E * H1 + H1 * H2 + H2 * O),
        transcendentals=0,
        bytes_accessed=B * (E * 4 + O * 4 + 4)
        + (E * H1 + H1 * H2 + H2 * O) * itemsize
        + (H1 + H2 + O) * 4,
    )

    out = pl.pallas_call(
        taskc_predict_kernel,
        out_shape=jax.ShapeDtypeStruct((B, O), jnp.float32),
        grid=grid,
        in_specs=[
            pl.BlockSpec((bb, E), lambda i: (i, 0)),     # x: tiled over batch
            pl.BlockSpec((bb, 1), lambda i: (i, 0)),     # bin_pred: tiled over batch
            pl.BlockSpec((E, H1), lambda i: (0, 0)),     # weights/biases: resident
            pl.BlockSpec((1, H1), lambda i: (0, 0)),
            pl.BlockSpec((H1, H2), lambda i: (0, 0)),
            pl.BlockSpec((1, H2), lambda i: (0, 0)),
            pl.BlockSpec((H2, O), lambda i: (0, 0)),
            pl.BlockSpec((1, O), lambda i: (0, 0)),
        ],
        out_specs=pl.BlockSpec((bb, O), lambda i: (i, 0)),
        compiler_params=pltpu.CompilerParams(
            dimension_semantics=("parallel",),
            vmem_limit_bytes=vmem_limit),
        cost_estimate=cost,
    )(x2, bin2, w1, b1, w2, b2, w3, b3)

    return out


# ----------------------------------------------------------------------------
# Synthetic parameters + references
# ----------------------------------------------------------------------------
def init_params(key, emb_size, in_size, out_size):
    h1, h2 = in_size
    ks = jax.random.split(key, 8)

    def lin(k, fan_in, fan_out):
        kw, kb = jax.random.split(k)
        bound = 1.0 / jnp.sqrt(fan_in)
        w = jax.random.uniform(kw, (fan_in, fan_out), jnp.float32, -bound, bound)
        b = jax.random.uniform(kb, (1, fan_out), jnp.float32, -bound, bound)
        return w, b

    w1, b1 = lin(ks[0], emb_size, h1)
    w2, b2 = lin(ks[1], h1, h2)
    w3, b3 = lin(ks[2], h2, out_size)

    def bn(kg, kb, km, kv, n):
        g = 1.0 + 0.1 * jax.random.normal(kg, (1, n), jnp.float32)
        be = 0.1 * jax.random.normal(kb, (1, n), jnp.float32)
        m = 0.1 * jax.random.normal(km, (1, n), jnp.float32)
        v = 1.0 + 0.1 * jax.random.uniform(kv, (1, n), jnp.float32)
        return g, be, m, v

    g1, be1, m1, v1 = bn(*jax.random.split(ks[3], 4), h1)
    g2, be2, m2, v2 = bn(*jax.random.split(ks[4], 4), h2)

    return dict(w1=w1, b1=b1, g1=g1, be1=be1, m1=m1, v1=v1,
                w2=w2, b2=b2, g2=g2, be2=be2, m2=m2, v2=v2,
                w3=w3, b3=b3)


def reference_forward_exact(x, bin_pred, p):
    """Pure-JAX f32 reference of the eval-mode PyTorch forward (BN un-folded)."""
    B = x.shape[0]
    hp = jax.lax.Precision.HIGHEST
    h = x.reshape(B, -1).astype(jnp.float32)
    h = jnp.dot(h, p["w1"], precision=hp) + p["b1"]
    h = (h - p["m1"]) / jnp.sqrt(p["v1"] + BN_EPS) * p["g1"] + p["be1"]
    h = jnp.where(h >= 0, h, NEG_SLOPE * h)
    h = jnp.dot(h, p["w2"], precision=hp) + p["b2"]
    h = (h - p["m2"]) / jnp.sqrt(p["v2"] + BN_EPS) * p["g2"] + p["be2"]
    h = jnp.where(h >= 0, h, NEG_SLOPE * h)
    out = jnp.dot(h, p["w3"], precision=hp) + p["b3"]
    onehot = jnp.array([1.0, 0.0, 0.0, 0.0], jnp.float32)
    return jnp.where((bin_pred == 0)[:, None], onehot[None, :], out)


def reference_forward_mirrored(x, bin_pred, p, use_bf16=True):
    """Reference mirroring the kernel's BN fold + bf16 matmul-input rounding."""
    B = x.shape[0]
    hp = jax.lax.Precision.HIGHEST
    f = fold_bn_params(p)
    q = (lambda a: a.astype(jnp.bfloat16).astype(jnp.float32)) if use_bf16 else (lambda a: a)
    h = q(x.reshape(B, -1).astype(jnp.float32))
    h = jnp.dot(h, q(f["w1"]), precision=hp) + f["b1"]
    h = jnp.where(h >= 0, h, NEG_SLOPE * h)
    h = jnp.dot(q(h), q(f["w2"]), precision=hp) + f["b2"]
    h = jnp.where(h >= 0, h, NEG_SLOPE * h)
    out = jnp.dot(q(h), q(f["w3"]), precision=hp) + f["b3"]
    onehot = jnp.array([1.0, 0.0, 0.0, 0.0], jnp.float32)
    return jnp.where((bin_pred == 0)[:, None], onehot[None, :], out)


if __name__ == "__main__":
    # Module config: emb_size=32, in_size=(64, 32), out_size=4
    # (the forward hard-codes a 4-way one-hot override).
    emb_size, in_size, out_size = 32, (64, 32), 4

    key = jax.random.PRNGKey(0)
    k_x, k_bin, k_p = jax.random.split(key, 3)
    params = init_params(k_p, emb_size, in_size, out_size)

    # --- demo: small batch, single exact tile -------------------------------
    B = 8
    x = jax.random.normal(k_x, (B, 4, 8), jnp.float32)   # flattened to (B, 32)
    bin_pred = jax.random.randint(k_bin, (B,), 0, 2, jnp.int32)

    out = jax.block_until_ready(taskc_predict_layer_h(x, bin_pred, params))
    assert out.shape == (B, out_size)

    ref_mirror = reference_forward_mirrored(x, bin_pred, params, use_bf16=True)
    assert jnp.allclose(out, ref_mirror, atol=1e-4, rtol=1e-4), "mismatch vs. mirrored reference"
    ref_exact = reference_forward_exact(x, bin_pred, params)
    assert jnp.allclose(out, ref_exact, atol=1e-1, rtol=1e-1), "mismatch vs. exact reference"

    # --- multi-step parallel grid (exercises >=2 tiles over the batch axis) --
    B2 = 64
    x2 = jax.random.normal(k_x, (B2, 4, 8), jnp.float32)
    bin2 = jax.random.randint(k_bin, (B2,), 0, 2, jnp.int32)
    out2 = jax.block_until_ready(
        taskc_predict_layer_h(x2, bin2, params, max_block_b=32))
    assert jnp.allclose(out2, reference_forward_mirrored(x2, bin2, params),
                        atol=1e-4, rtol=1e-4), "mismatch (multi-tile)"

    # --- partial tail tile (B not a multiple of the block; masked edge writes)
    B3 = 40
    x3 = jax.random.normal(k_x, (B3, 4, 8), jnp.float32)
    bin3 = jax.random.randint(k_bin, (B3,), 0, 2, jnp.int32)
    out3 = jax.block_until_ready(
        taskc_predict_layer_h(x3, bin3, params, max_block_b=32))
    assert jnp.allclose(out3, reference_forward_mirrored(x3, bin3, params),
                        atol=1e-4, rtol=1e-4), "mismatch (partial tail tile)"

    print("KERNEL_OK")
</pallas_src>

<mosaic_0001>
module attributes {stable_mosaic.version = 11 : i64} {
  func.func @taskc_predict_kernel(%arg0: i32, %arg1: memref<8x32xf32, #tpu.memory_space<vmem>>, %arg2: memref<8x1xi32, #tpu.memory_space<vmem>>, %arg3: memref<32x64xbf16, #tpu.memory_space<vmem>>, %arg4: memref<1x64xf32, #tpu.memory_space<vmem>>, %arg5: memref<64x32xbf16, #tpu.memory_space<vmem>>, %arg6: memref<1x32xf32, #tpu.memory_space<vmem>>, %arg7: memref<32x4xbf16, #tpu.memory_space<vmem>>, %arg8: memref<1x4xf32, #tpu.memory_space<vmem>>, %arg9: memref<8x4xf32, #tpu.memory_space<vmem>>) attributes {dimension_semantics = [#tpu.dimension_semantics<parallel>], iteration_bounds = array<i64: 1>, scalar_prefetch = 0 : i64, scratch_operands = 0 : i64, tpu.core_type = #tpu.core_type<tc>, window_params = [{transform_indices = @transform_0, window_bounds = array<i64: 8, 32>}, {transform_indices = @transform_1, window_bounds = array<i64: 8, 1>}, {pipeline_mode = #tpu.pipeline_mode<synchronous>, transform_indices = @transform_2, window_bounds = array<i64: 32, 64>}, {pipeline_mode = #tpu.pipeline_mode<synchronous>, transform_indices = @transform_3, window_bounds = array<i64: 1, 64>}, {pipeline_mode = #tpu.pipeline_mode<synchronous>, transform_indices = @transform_4, window_bounds = array<i64: 64, 32>}, {pipeline_mode = #tpu.pipeline_mode<synchronous>, transform_indices = @transform_5, window_bounds = array<i64: 1, 32>}, {pipeline_mode = #tpu.pipeline_mode<synchronous>, transform_indices = @transform_6, window_bounds = array<i64: 32, 4>}, {pipeline_mode = #tpu.pipeline_mode<synchronous>, transform_indices = @transform_7, window_bounds = array<i64: 1, 4>}, {transform_indices = @transform_8, window_bounds = array<i64: 8, 4>}]} {
    %c0 = arith.constant 0 : index
    %c0_0 = arith.constant 0 : index
    %0 = vector.load %arg1[%c0, %c0_0] : memref<8x32xf32, #tpu.memory_space<vmem>>, vector<8x32xf32>
    %1 = arith.truncf %0 : vector<8x32xf32> to vector<8x32xbf16>
    %c0_1 = arith.constant 0 : index
    %c0_2 = arith.constant 0 : index
    %2 = vector.load %arg3[%c0_1, %c0_2] : memref<32x64xbf16, #tpu.memory_space<vmem>>, vector<32x64xbf16>
    %cst = arith.constant dense<0.000000e+00> : vector<8x64xf32>
    %3 = tpu.matmul %1, %2, %cst {dimension_numbers = #tpu.dot_dimension_numbers<[1], [0], [0], [1], [0, 0, 1, 1], [], []>} : vector<8x32xbf16>, vector<32x64xbf16>, vector<8x64xf32> -> vector<8x64xf32>
    %c0_3 = arith.constant 0 : index
    %c0_4 = arith.constant 0 : index
    %4 = vector.load %arg4[%c0_3, %c0_4] : memref<1x64xf32, #tpu.memory_space<vmem>>, vector<1x64xf32>
    %5 = vector.broadcast %4 : vector<1x64xf32> to vector<8x64xf32>
    %6 = arith.addf %3, %5 : vector<8x64xf32>
    %cst_5 = arith.constant 0.000000e+00 : f32
    %7 = vector.broadcast %cst_5 : f32 to vector<8x64xf32>
    %8 = arith.cmpf oge, %6, %7 : vector<8x64xf32>
    %cst_6 = arith.constant 1.000000e-01 : f32
    %9 = vector.broadcast %cst_6 : f32 to vector<8x64xf32>
    %10 = arith.mulf %9, %6 : vector<8x64xf32>
    %11 = arith.select %8, %6, %10 : vector<8x64xi1>, vector<8x64xf32>
    %12 = arith.truncf %11 : vector<8x64xf32> to vector<8x64xbf16>
    %c0_7 = arith.constant 0 : index
    %c0_8 = arith.constant 0 : index
    %13 = vector.load %arg5[%c0_7, %c0_8] : memref<64x32xbf16, #tpu.memory_space<vmem>>, vector<64x32xbf16>
    %cst_9 = arith.constant dense<0.000000e+00> : vector<8x32xf32>
    %14 = tpu.matmul %12, %13, %cst_9 {dimension_numbers = #tpu.dot_dimension_numbers<[1], [0], [0], [1], [0, 0, 1, 1], [], []>} : vector<8x64xbf16>, vector<64x32xbf16>, vector<8x32xf32> -> vector<8x32xf32>
    %c0_10 = arith.constant 0 : index
    %c0_11 = arith.constant 0 : index
    %15 = vector.load %arg6[%c0_10, %c0_11] : memref<1x32xf32, #tpu.memory_space<vmem>>, vector<1x32xf32>
    %16 = vector.broadcast %15 : vector<1x32xf32> to vector<8x32xf32>
    %17 = arith.addf %14, %16 : vector<8x32xf32>
    %cst_12 = arith.constant 0.000000e+00 : f32
    %18 = vector.broadcast %cst_12 : f32 to vector<8x32xf32>
    %19 = arith.cmpf oge, %17, %18 : vector<8x32xf32>
    %cst_13 = arith.constant 1.000000e-01 : f32
    %20 = vector.broadcast %cst_13 : f32 to vector<8x32xf32>
    %21 = arith.mulf %20, %17 : vector<8x32xf32>
    %22 = arith.select %19, %17, %21 : vector<8x32xi1>, vector<8x32xf32>
    %23 = arith.truncf %22 : vector<8x32xf32> to vector<8x32xbf16>
    %c0_14 = arith.constant 0 : index
    %c0_15 = arith.constant 0 : index
    %24 = vector.load %arg7[%c0_14, %c0_15] : memref<32x4xbf16, #tpu.memory_space<vmem>>, vector<32x4xbf16>
    %cst_16 = arith.constant dense<0.000000e+00> : vector<8x4xf32>
    %25 = tpu.matmul %23, %24, %cst_16 {dimension_numbers = #tpu.dot_dimension_numbers<[1], [0], [0], [1], [0, 0, 1, 1], [], []>} : vector<8x32xbf16>, vector<32x4xbf16>, vector<8x4xf32> -> vector<8x4xf32>
    %c0_17 = arith.constant 0 : index
    %c0_18 = arith.constant 0 : index
    %26 = vector.load %arg8[%c0_17, %c0_18] : memref<1x4xf32, #tpu.memory_space<vmem>>, vector<1x4xf32>
    %27 = vector.broadcast %26 : vector<1x4xf32> to vector<8x4xf32>
    %28 = arith.addf %25, %27 : vector<8x4xf32>
    %29 = tpu.iota {dimensions = array<i32: 1>} : vector<8x4xi32>
    %c0_i32 = arith.constant 0 : i32
    %30 = vector.broadcast %c0_i32 : i32 to vector<8x4xi32>
    %31 = arith.cmpi eq, %29, %30 : vector<8x4xi32>
    %32 = arith.extui %31 : vector<8x4xi1> to vector<8x4xi32>
    %33 = arith.sitofp %32 : vector<8x4xi32> to vector<8x4xf32>
    %c0_19 = arith.constant 0 : index
    %c0_20 = arith.constant 0 : index
    %34 = vector.load %arg2[%c0_19, %c0_20] : memref<8x1xi32, #tpu.memory_space<vmem>>, vector<8x1xi32>
    %c0_i32_21 = arith.constant 0 : i32
    %35 = vector.broadcast %c0_i32_21 : i32 to vector<8x1xi32>
    %36 = arith.cmpi eq, %34, %35 : vector<8x1xi32>
    %37 = vector.shape_cast %36 : vector<8x1xi1> to vector<8x1xi1>
    %38 = vector.broadcast %37 : vector<8x1xi1> to vector<8x4xi1>
    %39 = arith.select %38, %33, %28 : vector<8x4xi1>, vector<8x4xf32>
    %c0_22 = arith.constant 0 : index
    %c0_23 = arith.constant 0 : index
    %40 = vector.load %arg9[%c0_22, %c0_23] : memref<8x4xf32, #tpu.memory_space<vmem>>, vector<8x4xf32>
    tpu.vector_store %arg9[%c0_22, %c0_23], %39 {strides = array<i32>} : memref<8x4xf32, #tpu.memory_space<vmem>>, vector<8x4xf32>,
    return
  }
  func.func @transform_0(%arg0: i32) -> (i32, i32) {
    %c0_i32 = arith.constant 0 : i32
    %c0_i32_0 = arith.constant 0 : i32
    return %arg0, %c0_i32 : i32, i32
  }
  func.func @transform_1(%arg0: i32) -> (i32, i32) {
    %c0_i32 = arith.constant 0 : i32
    %c0_i32_0 = arith.constant 0 : i32
    return %arg0, %c0_i32 : i32, i32
  }
  func.func @transform_2(%arg0: i32) -> (i32, i32) {
    %c0_i32 = arith.constant 0 : i32
    %c0_i32_0 = arith.constant 0 : i32
    %c0_i32_1 = arith.constant 0 : i32
    return %c0_i32, %c0_i32_0 : i32, i32
  }
  func.func @transform_3(%arg0: i32) -> (i32, i32) {
    %c0_i32 = arith.constant 0 : i32
    %c0_i32_0 = arith.constant 0 : i32
    %c0_i32_1 = arith.constant 0 : i32
    return %c0_i32, %c0_i32_0 : i32, i32
  }
  func.func @transform_4(%arg0: i32) -> (i32, i32) {
    %c0_i32 = arith.constant 0 : i32
    %c0_i32_0 = arith.constant 0 : i32
    %c0_i32_1 = arith.constant 0 : i32
    return %c0_i32, %c0_i32_0 : i32, i32
  }
  func.func @transform_5(%arg0: i32) -> (i32, i32) {
    %c0_i32 = arith.constant 0 : i32
    %c0_i32_0 = arith.constant 0 : i32
    %c0_i32_1 = arith.constant 0 : i32
    return %c0_i32, %c0_i32_0 : i32, i32
  }
  func.func @transform_6(%arg0: i32) -> (i32, i32) {
    %c0_i32 = arith.constant 0 : i32
    %c0_i32_0 = arith.constant 0 : i32
    %c0_i32_1 = arith.constant 0 : i32
    return %c0_i32, %c0_i32_0 : i32, i32
  }
  func.func @transform_7(%arg0: i32) -> (i32, i32) {
    %c0_i32 = arith.constant 0 : i32
    %c0_i32_0 = arith.constant 0 : i32
    %c0_i32_1 = arith.constant 0 : i32
    return %c0_i32, %c0_i32_0 : i32, i32
  }
  func.func @transform_8(%arg0: i32) -> (i32, i32) {
    %c0_i32 = arith.constant 0 : i32
    %c0_i32_0 = arith.constant 0 : i32
    return %arg0, %c0_i32 : i32, i32
  }
}

</mosaic_0001>

<llo_original>
// kernel: tpu_custom_call.1
$region0: #{tpu_custom_call.1}
  #allocation0 [shape = 'u32[]', space=smem, size = 0x4, offset = 0x4, fixed_abs, tag = 'smem constant byte address 0x4 - core index']
  #allocation1 [shape = 'u32[144,128]{1,0:T(1,128)}', space=vmem, size = 0x12000, scoped, tag = 'internal scratch']
  %s0 = inlined_call_operand.vmem [shape: f32[8,32], index: 0, kind: input, shape index: {}]
  %s1 = inlined_call_operand.vmem [shape: s32[8,1], index: 1, kind: input, shape index: {}]
  %s2 = inlined_call_operand.vmem [shape: bf16[32,64], index: 2, kind: input, shape index: {}]
  %s3 = inlined_call_operand.vmem [shape: f32[1,64], index: 3, kind: input, shape index: {}]
  %s4 = inlined_call_operand.vmem [shape: bf16[64,32], index: 4, kind: input, shape index: {}]
  %s5 = inlined_call_operand.vmem [shape: f32[1,32], index: 5, kind: input, shape index: {}]
  %s6 = inlined_call_operand.vmem [shape: bf16[32,4], index: 6, kind: input, shape index: {}]
  %s7 = inlined_call_operand.vmem [shape: f32[1,4], index: 7, kind: input, shape index: {}]
  %s8 = inlined_call_operand.vmem [shape: f32[8,4], index: 8, kind: output, shape index: {}]
  %s9 = sld [smem:[#allocation0]]
  $region42: #{tpu_custom_call.1} parent=0
    _
  %s11 = ssub.s32 1, %s9
  %s12 = scalar_select 0, %s11, %s9
  // Predicated region
  $region2: #{tpu_custom_call.1} parent=0 // pred_check
    _
  $region3: #{tpu_custom_call.1} parent=0 // pred_check_branch
    %14 = sbr.rel (0) target = $region5
  $region4: #{tpu_custom_call.1} parent=0 // pred_region
    _
  $region5: #{tpu_custom_call.1} parent=0 // pred_fallthru
    _
  // Predicated region
  $region6: #{tpu_custom_call.1} parent=0 // pred_check
    _
  $region7: #{tpu_custom_call.1} parent=0 // pred_check_branch
    %16 = sbr.rel (0) target = $region9
  $region8: #{tpu_custom_call.1} parent=0 // pred_region
    _
  $region9: #{tpu_custom_call.1} parent=0 // pred_fallthru
    _
  // Predicated region
  $region10: #{tpu_custom_call.1} parent=0 // pred_check
    _
  $region11: #{tpu_custom_call.1} parent=0 // pred_check_branch
    %18 = sbr.rel (0) target = $region13
  $region12: #{tpu_custom_call.1} parent=0 // pred_region
    _
  $region13: #{tpu_custom_call.1} parent=0 // pred_fallthru
    _
  // Predicated region
  $region14: #{tpu_custom_call.1} parent=0 // pred_check
    _
  $region15: #{tpu_custom_call.1} parent=0 // pred_check_branch
    %20 = sbr.rel (0) target = $region17
  $region16: #{tpu_custom_call.1} parent=0 // pred_region
    _
  $region17: #{tpu_custom_call.1} parent=0 // pred_fallthru
    _
  // Predicated region
  $region18: #{tpu_custom_call.1} parent=0 // pred_check
    _
  $region19: #{tpu_custom_call.1} parent=0 // pred_check_branch
    %22 = sbr.rel (0) target = $region21
  $region20: #{tpu_custom_call.1} parent=0 // pred_region
    _
  $region21: #{tpu_custom_call.1} parent=0 // pred_fallthru
    _
  // Predicated region
  $region22: #{tpu_custom_call.1} parent=0 // pred_check
    _
  $region23: #{tpu_custom_call.1} parent=0 // pred_check_branch
    %24 = sbr.rel (0) target = $region25
  $region24: #{tpu_custom_call.1} parent=0 // pred_region
    _
  $region25: #{tpu_custom_call.1} parent=0 // pred_fallthru
    _
  // Predicated region
  $region26: #{tpu_custom_call.1} parent=0 // pred_check
    _
  $region27: #{tpu_custom_call.1} parent=0 // pred_check_branch
    %26 = sbr.rel (0) target = $region29
  $region28: #{tpu_custom_call.1} parent=0 // pred_region
    _
  $region29: #{tpu_custom_call.1} parent=0 // pred_fallthru
    _
  // Predicated region
  $region30: #{tpu_custom_call.1} parent=0 // pred_check
    _
  $region31: #{tpu_custom_call.1} parent=0 // pred_check_branch
    %28 = sbr.rel (0) target = $region33
  $region32: #{tpu_custom_call.1} parent=0 // pred_region
    _
  $region33: #{tpu_custom_call.1} parent=0 // pred_fallthru
    _
  %v30 = vld [vmem:[%s0] sm:$0xff]
  %v31 = vpack.c.bf16 %v30, %v30
  %v32 = vld [vmem:[%s2] sm:$0xf]
  %v33 = vld [vmem:[%s2 + $0x4] sm:$0xf]
  %v34 = vld [vmem:[%s2 + $0x8] sm:$0xf]
  %v35 = vld [vmem:[%s2 + $0xc] sm:$0xf]
  %v36 = vld [vmem:[%s3] sm:$0x1]
  %v38 = vlaneseq
  %v39 = vshrl.u32 %v38, 7
  %v40 = vsub.s32 0, %v39
  %v41 = vrot.slane %v36, %v40
  %v47 = vunpack.c.l.b16 %v32
  %v48 = vunpack.c.l.b16 %v33
  %v49 = vunpack.c.l.b16 %v34
  %v50 = vunpack.c.l.b16 %v35
  %v51 = vpack.c.b16 %v48, %v47
  %v52 = vpack.c.b16 %v50, %v49
  %vm55 = vcmask 261120
  %v57 = vsel %vm55, %v31, 0
  %59 = vmatprep.subr.bf16.mxu0 0
  %60 = vmatpush1.bf16.msra.mxu0 %v51
  %61 = vmatprep.subr.bf16.mxu0 0
  %62 = vmatpush1.bf16.msra.mxu0 %v52
  %63 = vmatprep.subr.bf16.mxu0 0
  %64 = vmatpush1.bf16.msra.mxu0 0
  %65 = vmatprep.subr.bf16.mxu0 0
  %66 = vmatpush1.bf16.msra.mxu0 0
  %67 = vmatprep.subr.bf16.mxu0 0
  %68 = vmatpush1.bf16.msra.mxu0 0
  %69 = vmatprep.subr.bf16.mxu0 0
  %70 = vmatpush1.bf16.msra.mxu0 0
  %71 = vmatprep.subr.bf16.mxu0 0
  %72 = vmatpush1.bf16.msra.mxu0 0
  %73 = vmatprep.subr.bf16.mxu0 0
  %74 = vmatpush1.bf16.msra.mxu0 0
  %75 = vmatprep.subr.bf16.mxu0 0
  %76 = vmatpush1.bf16.msra.mxu0 0
  %77 = vmatprep.subr.bf16.mxu0 0
  %78 = vmatpush1.bf16.msra.mxu0 0
  %79 = vmatprep.subr.bf16.mxu0 0
  %80 = vmatpush1.bf16.msra.mxu0 0
  %81 = vmatprep.subr.bf16.mxu0 0
  %82 = vmatpush1.bf16.msra.mxu0 0
  %83 = vmatprep.subr.bf16.mxu0 0
  %84 = vmatpush1.bf16.msra.mxu0 0
  %85 = vmatprep.subr.bf16.mxu0 0
  %86 = vmatpush1.bf16.msra.mxu0 0
  %87 = vmatprep.subr.bf16.mxu0 0
  %88 = vmatpush1.bf16.msra.mxu0 0
  %89 = vmatprep.subr.bf16.mxu0 0
  %90 = vmatpush1.bf16.msra.mxu0 0
  %91 = vmatprep.mubr.bf16.mxu0 0
  %92 = vmatmul.mubr.bf16.gmra.mrb[0].mxu0 %v57
  %v93 = vpop.f32.mrb[0].mxu0
  %v94 = vadd.f32 %v41, %v93
  %v95 = vpop.f32.mrb[0].mxu0
  %v96 = vpop.f32.mrb[0].mxu0
  %v97 = vpop.f32.mrb[0].mxu0
  %98 = vdwg.mxu0
  %vm99 = vcmp.ge.f32.partialorder %v94, 0.0
  %v100 = vmul.f32 %v94, 0.1
  %v101 = vsel %vm99, %v94, %v100
  %v102 = vpack.c.bf16 %v101, %v101
  %v103 = vld [vmem:[%s4] sm:$0xf]
  %v104 = vld [vmem:[%s4 + $0x4] sm:$0xf]
  %v105 = vld [vmem:[%s4 + $0x8] sm:$0xf]
  %v106 = vld [vmem:[%s4 + $0xc] sm:$0xf]
  %v107 = vld [vmem:[%s4 + $0x10] sm:$0xf]
  %v108 = vld [vmem:[%s4 + $0x14] sm:$0xf]
  %v109 = vld [vmem:[%s4 + $0x18] sm:$0xf]
  %v110 = vld [vmem:[%s4 + $0x1c] sm:$0xf]
  %v111 = vld [vmem:[%s5] sm:$0x1]
  %v113 = vlaneseq
  %v114 = vshrl.u32 %v113, 7
  %v115 = vsub.s32 0, %v114
  %v116 = vrot.slane %v111, %v115
  %v126 = vunpack.c.l.b16 %v103
  %v127 = vunpack.c.l.b16 %v104
  %v128 = vunpack.c.l.b16 %v105
  %v129 = vunpack.c.l.b16 %v106
  %v130 = vunpack.c.l.b16 %v107
  %v131 = vunpack.c.l.b16 %v108
  %v132 = vunpack.c.l.b16 %v109
  %v133 = vunpack.c.l.b16 %v110
  %v134 = vpack.c.b16 %v127, %v126
  %v135 = vpack.c.b16 %v129, %v128
  %v136 = vpack.c.b16 %v131, %v130
  %v137 = vpack.c.b16 %v133, %v132
  %vm142 = vcmask 523264
  %v144 = vsel %vm142, %v102, 0
  %146 = vmatprep.subr.bf16.mxu0 0
  %147 = vmatpush1.bf16.msra.mxu0 %v134
  %148 = vmatprep.subr.bf16.mxu0 0
  %149 = vmatpush1.bf16.msra.mxu0 %v135
  %150 = vmatprep.subr.bf16.mxu0 0
  %151 = vmatpush1.bf16.msra.mxu0 %v136
  %152 = vmatprep.subr.bf16.mxu0 0
  %153 = vmatpush1.bf16.msra.mxu0 %v137
  %154 = vmatprep.subr.bf16.mxu0 0
  %155 = vmatpush1.bf16.msra.mxu0 0
  %156 = vmatprep.subr.bf16.mxu0 0
  %157 = vmatpush1.bf16.msra.mxu0 0
  %158 = vmatprep.subr.bf16.mxu0 0
  %159 = vmatpush1.bf16.msra.mxu0 0
  %160 = vmatprep.subr.bf16.mxu0 0
  %161 = vmatpush1.bf16.msra.mxu0 0
  %162 = vmatprep.subr.bf16.mxu0 0
  %163 = vmatpush1.bf16.msra.mxu0 0
  %164 = vmatprep.subr.bf16.mxu0 0
  %165 = vmatpush1.bf16.msra.mxu0 0
  %166 = vmatprep.subr.bf16.mxu0 0
  %167 = vmatpush1.bf16.msra.mxu0 0
  %168 = vmatprep.subr.bf16.mxu0 0
  %169 = vmatpush1.bf16.msra.mxu0 0
  %170 = vmatprep.subr.bf16.mxu0 0
  %171 = vmatpush1.bf16.msra.mxu0 0
  %172 = vmatprep.subr.bf16.mxu0 0
  %173 = vmatpush1.bf16.msra.mxu0 0
  %174 = vmatprep.subr.bf16.mxu0 0
  %175 = vmatpush1.bf16.msra.mxu0 0
  %176 = vmatprep.subr.bf16.mxu0 0
  %177 = vmatpush1.bf16.msra.mxu0 0
  %178 = vmatprep.mubr.bf16.mxu0 0
  %179 = vmatmul.mubr.bf16.gmra.mrb[0].mxu0 %v144
  %v180 = vpop.f32.mrb[0].mxu0
  %v181 = vadd.f32 %v116, %v180
  %v182 = vpop.f32.mrb[0].mxu0
  %v183 = vpop.f32.mrb[0].mxu0
  %v184 = vpop.f32.mrb[0].mxu0
  %185 = vdwg.mxu0
  %vm186 = vcmp.ge.f32.partialorder %v181, 0.0
  %v187 = vmul.f32 %v181, 0.1
  %v188 = vsel %vm186, %v181, %v187
  %v189 = vpack.c.bf16 %v188, %v188
  %v190 = vld [vmem:[%s6] sm:$0xf]
  %v191 = vld [vmem:[%s6 + $0x4] sm:$0xf]
  %v192 = vld [vmem:[%s6 + $0x8] sm:$0xf]
  %v193 = vld [vmem:[%s6 + $0xc] sm:$0xf]
  %v194 = vld [vmem:[%s7] sm:$0x1]
  %v196 = vlaneseq
  %v197 = vshrl.u32 %v196, 7
  %v198 = vsub.s32 0, %v197
  %v199 = vrot.slane %v194, %v198
  %v205 = vunpack.c.l.b16 %v190
  %v206 = vunpack.c.l.b16 %v191
  %v207 = vunpack.c.l.b16 %v192
  %v208 = vunpack.c.l.b16 %v193
  %v209 = vpack.c.b16 %v206, %v205
  %v210 = vpack.c.b16 %v208, %v207
  %v214 = vsel %vm55, %v189, 0
  %216 = vmatprep.subr.bf16.mxu0 0
  %217 = vmatpush1.bf16.msra.mxu0 %v209
  %218 = vmatprep.subr.bf16.mxu0 0
  %219 = vmatpush1.bf16.msra.mxu0 %v210
  %220 = vmatprep.subr.bf16.mxu0 0
  %221 = vmatpush1.bf16.msra.mxu0 0
  %222 = vmatprep.subr.bf16.mxu0 0
  %223 = vmatpush1.bf16.msra.mxu0 0
  %224 = vmatprep.subr.bf16.mxu0 0
  %225 = vmatpush1.bf16.msra.mxu0 0
  %226 = vmatprep.subr.bf16.mxu0 0
  %227 = vmatpush1.bf16.msra.mxu0 0
  %228 = vmatprep.subr.bf16.mxu0 0
  %229 = vmatpush1.bf16.msra.mxu0 0
  %230 = vmatprep.subr.bf16.mxu0 0
  %231 = vmatpush1.bf16.msra.mxu0 0
  %232 = vmatprep.subr.bf16.mxu0 0
  %233 = vmatpush1.bf16.msra.mxu0 0
  %234 = vmatprep.subr.bf16.mxu0 0
  %235 = vmatpush1.bf16.msra.mxu0 0
  %236 = vmatprep.subr.bf16.mxu0 0
  %237 = vmatpush1.bf16.msra.mxu0 0
  %238 = vmatprep.subr.bf16.mxu0 0
  %239 = vmatpush1.bf16.msra.mxu0 0
  %240 = vmatprep.subr.bf16.mxu0 0
  %241 = vmatpush1.bf16.msra.mxu0 0
  %242 = vmatprep.subr.bf16.mxu0 0
  %243 = vmatpush1.bf16.msra.mxu0 0
  %244 = vmatprep.subr.bf16.mxu0 0
  %245 = vmatpush1.bf16.msra.mxu0 0
  %246 = vmatprep.subr.bf16.mxu0 0
  %247 = vmatpush1.bf16.msra.mxu0 0
  %248 = vmatprep.mubr.bf16.mxu0 0
  %249 = vmatmul.mubr.bf16.gmra.mrb[0].mxu0 %v214
  %v250 = vpop.f32.mrb[0].mxu0
  %v251 = vadd.f32 %v199, %v250
  %v252 = vpop.f32.mrb[0].mxu0
  %v253 = vpop.f32.mrb[0].mxu0
  %v254 = vpop.f32.mrb[0].mxu0
  %255 = vdwg.mxu0
  %v256 = vlaneseq
  %v257 = vand.u32 %v256, 127
  %vm258 = vcmp.eq.s32.totalorder %v257, 0
  %v259 = vsel %vm258, 1, 0
  %v260 = vcvt.s32.f32 %v259
  %v261 = vld [vmem:[%s1] sm:$0xff]
  %vm262 = vcmp.eq.s32.totalorder %v261, 0
  %v263 = vsel %vm262, 1, 0
  %264 = vset.pattern.permute.xlu0 0
  %265 = vperm.xlu0 %264, %v263
  %v266 = vpop.permute.xlu0 %265
  %vm267 = vcmp.eq.s32.totalorder %v266, 1
  %v268 = vsel %vm267, %v260, %v251
  %vm269 = vcmask 31744
  %270 = vst.msk [vmem:[%s8] sm:$0xff] %vm269, %v268
  // Predicated region
  $region34: #{tpu_custom_call.1} parent=0 // pred_check
    _
  $region35: #{tpu_custom_call.1} parent=0 // pred_check_branch
    %272 = sbr.rel (0) target = $region37
  $region36: #{tpu_custom_call.1} parent=0 // pred_region
    _
  $region37: #{tpu_custom_call.1} parent=0 // pred_fallthru
    _
  // Predicated region
  $region38: #{tpu_custom_call.1} parent=0 // pred_check
    _
  $region39: #{tpu_custom_call.1} parent=0 // pred_check_branch
    %274 = sbr.rel (0) target = $region41
  $region40: #{tpu_custom_call.1} parent=0 // pred_region
    _
  $region41: #{tpu_custom_call.1} parent=0 // pred_fallthru
    _

</llo_original>
